<compile_context>
chip_gen: v7x
topology: tpu7x:2x2x1
jax: 0.10.0
libtpu: 0.0.40
codegen_flags: <defaults>
</compile_context>

<pallas_src>
import functools

import jax
import jax.numpy as jnp
from jax.experimental import pallas as pl
from jax.experimental.pallas import tpu as pltpu


def _round_up(x, m):
    return (x + m - 1) // m * m


def _align_down(x, m):
    return (x // m) * m


# ---------------------------------------------------------------------------
# Kernels
# ---------------------------------------------------------------------------
def _ffn_fused_kernel(x_ref, w1_ref, b1_ref, w2_ref, b2_ref, o_ref, *,
                      compute_dtype):
    """Single-pf-tile case: both matmuls fused, no accumulator needed."""
    x = x_ref[...].astype(compute_dtype)
    h = jnp.dot(x, w1_ref[...], preferred_element_type=jnp.float32)
    h = jnp.maximum(h + b1_ref[...], 0.0)
    # TODO(synk): dropout is identity at inference; training-mode dropout via
    # pltpu.prng_random_bits could be added behind a flag.
    y = jnp.dot(h.astype(compute_dtype), w2_ref[...],
                preferred_element_type=jnp.float32)
    o_ref[...] = (y + b2_ref[...]).astype(o_ref.dtype)


def _ffn_blocked_out_acc_kernel(x_ref, w1_ref, b1_ref, w2_ref, b2_ref, o_ref,
                                *, compute_dtype):
    """pf blocked; the f32 output block doubles as the accumulator (it stays
    resident across the pf grid axis). b2 is folded into the init step."""
    j = pl.program_id(1)

    @pl.when(j == 0)
    def _init():
        o_ref[...] = jnp.broadcast_to(b2_ref[...], o_ref.shape)

    x = x_ref[...].astype(compute_dtype)
    h = jnp.dot(x, w1_ref[...], preferred_element_type=jnp.float32)
    h = jnp.maximum(h + b1_ref[...], 0.0)
    o_ref[...] += jnp.dot(h.astype(compute_dtype), w2_ref[...],
                          preferred_element_type=jnp.float32)


def _ffn_blocked_scratch_kernel(x_ref, w1_ref, b1_ref, w2_ref, b2_ref, o_ref,
                                acc_ref, *, compute_dtype):
    """pf blocked with a separate f32 accumulator (non-f32 output dtype)."""
    j = pl.program_id(1)

    @pl.when(j == 0)
    def _init():
        acc_ref[...] = jnp.broadcast_to(b2_ref[...], acc_ref.shape)

    x = x_ref[...].astype(compute_dtype)
    h = jnp.dot(x, w1_ref[...], preferred_element_type=jnp.float32)
    h = jnp.maximum(h + b1_ref[...], 0.0)
    acc_ref[...] += jnp.dot(h.astype(compute_dtype), w2_ref[...],
                            preferred_element_type=jnp.float32)

    @pl.when(j == pl.num_programs(1) - 1)
    def _finalize():
        o_ref[...] = acc_ref[...].astype(o_ref.dtype)


# ---------------------------------------------------------------------------
# Wrapper
# ---------------------------------------------------------------------------
def _vmem_budget_bytes():
    """Generation-aware usable-VMEM budget (per TensorCore)."""
    try:
        cap = int(pltpu.get_tpu_info().vmem_capacity_bytes)
    except Exception:          # unknown generation / query unavailable
        cap = 64 << 20         # conservative: v7x per-TC physical VMEM
    # ~78%: ~100 MiB on v5e/v6e (128 MiB phys), ~50 MiB on v7x (64 MiB phys).
    # Leaves headroom for compiler-internal scratch and extra double buffers.
    return int(cap * 0.78)


@functools.partial(jax.jit, static_argnames=("tm", "max_tpf", "compute_dtype"))
def positionwise_feedforward(x, w1, b1, w2, b2, *, tm=512, max_tpf=2048,
                             compute_dtype=jnp.bfloat16):
    """x: [batch, seq, hid]; w1: [hid, pf]; b1: [pf]; w2: [pf, hid]; b2: [hid].

    PyTorch's nn.Linear weight is [out, in]; here W = weight.T ([in, out]).
    For best throughput store w1/w2 pre-cast to `compute_dtype` (bf16 at rest)
    so the wrapper never re-casts them per call.
    """
    batch, seq, hid = x.shape
    pf = w1.shape[1]
    M = batch * seq
    out_dtype = x.dtype
    cdt = jnp.dtype(compute_dtype)

    xbytes = jnp.dtype(x.dtype).itemsize
    obytes = jnp.dtype(out_dtype).itemsize
    wbytes = cdt.itemsize
    acc_in_out = jnp.dtype(out_dtype) == jnp.float32

    # Sublane alignment of the row (second-to-last) block dim.
    row_align = max(8, 32 // min(xbytes, obytes, 4))

    budget = _vmem_budget_bytes()

    # ---- static tile selection (all trace-time Python) ---------------------
    def estimate(tm_e, tpf_e, n_pf):
        w_buf = 1 if n_pf == 1 else 2              # const blocks single-buffer
        est = (2 * tm_e * hid * xbytes             # x tile (double-buffered)
               + w_buf * 2 * hid * tpf_e * wbytes  # W1 + W2 slices
               + w_buf * tpf_e * 4 + hid * 4       # b1 slice + b2
               + 2 * tm_e * hid * obytes           # out tile (double-buffered)
               + tm_e * tpf_e * 4)                 # f32 ReLU intermediate
        if n_pf > 1 and not acc_in_out:
            est += tm_e * hid * 4                  # separate f32 accumulator
        return est

    def pick_pf_tile(cap):
        if pf <= cap:                              # fully resident pf
            return pf, pf
        # largest lane-aligned (x128) divisor of pf that is <= cap
        t = min(_align_down(cap, 128), _align_down(pf, 128))
        while t >= 128:
            if pf % t == 0:
                return t, pf
            t -= 128
        # no lane-aligned divisor: zero-pad pf (exact: relu(0)*0-rows == 0)
        t = max(128, _align_down(cap, 128))
        return t, _round_up(pf, t)

    M_al = _round_up(M, row_align)
    if M_al >= 2 * row_align:
        # at least 2 row tiles so both v7x TensorCores get work
        meg_cap = max(row_align, _align_down(M_al // 2, row_align))
    else:
        meg_cap = M_al
    tm_init = max(row_align,
                  min(max(_align_down(tm, row_align), row_align), meg_cap, M_al))
    tm_floor = max(row_align, min(256, tm_init))

    caps = [pf, max(128, max_tpf)]
    c = max(128, max_tpf) // 2
    while c >= 128:
        caps.append(c)
        c //= 2

    chosen = None
    for cap in caps:
        tpf_e, pf_p = pick_pf_tile(cap)
        n_pf_c = pf_p // tpf_e
        tm_e = tm_init
        while tm_e > tm_floor and estimate(tm_e, tpf_e, n_pf_c) > budget:
            tm_e = max(tm_floor, _align_down(tm_e // 2, row_align))
        if estimate(tm_e, tpf_e, n_pf_c) <= budget:
            chosen = (tm_e, tpf_e, pf_p, n_pf_c)
            break
    if chosen is None:
        # last resort: smallest lane-aligned pf tile, shrink rows to minimum
        tpf_e, pf_p = pick_pf_tile(128)
        n_pf_c = pf_p // tpf_e
        tm_e = tm_floor
        while tm_e > row_align and estimate(tm_e, tpf_e, n_pf_c) > budget:
            tm_e = max(row_align, _align_down(tm_e // 2, row_align))
        chosen = (tm_e, tpf_e, pf_p, n_pf_c)
    tm_eff, tpf_eff, pf_pad, n_pf = chosen

    # Prefer a row tile that divides M exactly -> no wrapper-side pad of x.
    if M % tm_eff != 0:
        t = tm_eff
        while t >= max(row_align, tm_eff // 2):
            if t % row_align == 0 and M % t == 0:
                tm_eff = t
                break
            t -= row_align
    M_pad = _round_up(M, tm_eff)
    n_rows = M_pad // tm_eff

    # ---- operands (no wrapper pass over x unless padding is unavoidable) ---
    x2d = x.reshape(M, hid)
    if M_pad != M:
        x2d = jnp.pad(x2d, ((0, M_pad - M), (0, 0)))
    w1c = w1 if w1.dtype == cdt else w1.astype(cdt)
    w2c = w2 if w2.dtype == cdt else w2.astype(cdt)
    b1v = b1.reshape(1, pf).astype(jnp.float32)
    b2v = b2.reshape(1, hid).astype(jnp.float32)
    if pf_pad != pf:
        # zero columns of W1 / zero rows of W2 contribute exactly 0.
        w1c = jnp.pad(w1c, ((0, 0), (0, pf_pad - pf)))
        b1v = jnp.pad(b1v, ((0, 0), (0, pf_pad - pf)))
        w2c = jnp.pad(w2c, ((0, pf_pad - pf), (0, 0)))

    # Single-buffer operands whose block index never changes over the grid.
    const = functools.partial(pl.BlockSpec, pipeline_mode=pl.Buffered(1))

    if n_pf == 1:
        grid = (n_rows,)
        in_specs = [
            pl.BlockSpec((tm_eff, hid), lambda i: (i, 0)),       # x rows
            const((hid, pf_pad), lambda i: (0, 0)),              # W1 resident
            const((1, pf_pad), lambda i: (0, 0)),                # b1
            const((pf_pad, hid), lambda i: (0, 0)),              # W2 resident
            const((1, hid), lambda i: (0, 0)),                   # b2
        ]
        out_specs = pl.BlockSpec((tm_eff, hid), lambda i: (i, 0))
        scratch_shapes = []
        kernel = functools.partial(_ffn_fused_kernel, compute_dtype=cdt)
        dims = ("parallel",)
    else:
        grid = (n_rows, n_pf)
        in_specs = [
            pl.BlockSpec((tm_eff, hid), lambda i, j: (i, 0)),    # x (resident over j)
            pl.BlockSpec((hid, tpf_eff), lambda i, j: (0, j)),   # W1 slice
            pl.BlockSpec((1, tpf_eff), lambda i, j: (0, j)),     # b1 slice
            pl.BlockSpec((tpf_eff, hid), lambda i, j: (j, 0)),   # W2 slice
            const((1, hid), lambda i, j: (0, 0)),                # b2 (const)
        ]
        out_specs = pl.BlockSpec((tm_eff, hid), lambda i, j: (i, 0))
        if acc_in_out:
            scratch_shapes = []
            kernel = functools.partial(_ffn_blocked_out_acc_kernel,
                                       compute_dtype=cdt)
        else:
            scratch_shapes = [pltpu.VMEM((tm_eff, hid), jnp.float32)]
            kernel = functools.partial(_ffn_blocked_scratch_kernel,
                                       compute_dtype=cdt)
        dims = ("parallel", "arbitrary")

    est = estimate(tm_eff, tpf_eff, n_pf)
    vmem_limit = int(min(budget, max(2 * est + (16 << 20), 32 << 20)))

    # Weights are re-streamed from HBM once per row tile only when pf is
    # blocked; fully-resident weights are fetched once.
    w_stream = n_rows if n_pf > 1 else 1
    cost = pl.CostEstimate(
        flops=4 * M_pad * hid * pf_pad,            # two matmuls
        transcendentals=0,
        bytes_accessed=int(M_pad * hid * (xbytes + obytes)
                           + w_stream * 2 * hid * pf_pad * wbytes
                           + (pf_pad + hid) * 4),
    )

    out2d = pl.pallas_call(
        kernel,
        out_shape=jax.ShapeDtypeStruct((M_pad, hid), out_dtype),
        grid_spec=pltpu.PrefetchScalarGridSpec(
            num_scalar_prefetch=0,
            grid=grid,
            in_specs=in_specs,
            out_specs=out_specs,
            scratch_shapes=scratch_shapes,
        ),
        compiler_params=pltpu.CompilerParams(
            dimension_semantics=dims,
            vmem_limit_bytes=vmem_limit,
        ),
        cost_estimate=cost,
    )(x2d, w1c, b1v, w2c, b2v)

    if M_pad != M:
        out2d = out2d[:M]
    return out2d.reshape(batch, seq, hid)


if __name__ == "__main__":
    # Small shapes consistent with the module's forward.
    batch, seq, hid_dim, pf_dim = 2, 8, 32, 64
    key = jax.random.PRNGKey(0)
    kx, kw1, kb1, kw2, kb2 = jax.random.split(key, 5)

    # Deterministic parameter init (PyTorch-Linear-like uniform scaling).
    lim1 = 1.0 / (hid_dim ** 0.5)
    lim2 = 1.0 / (pf_dim ** 0.5)
    w1 = jax.random.uniform(kw1, (hid_dim, pf_dim), jnp.float32, -lim1, lim1)
    b1 = jax.random.uniform(kb1, (pf_dim,), jnp.float32, -lim1, lim1)
    w2 = jax.random.uniform(kw2, (pf_dim, hid_dim), jnp.float32, -lim2, lim2)
    b2 = jax.random.uniform(kb2, (hid_dim,), jnp.float32, -lim2, lim2)
    x = jax.random.normal(kx, (batch, seq, hid_dim), jnp.float32)

    # Keep weights in the compute dtype at rest (no per-call re-cast).
    w1_bf16 = w1.astype(jnp.bfloat16)
    w2_bf16 = w2.astype(jnp.bfloat16)

    out = positionwise_feedforward(x, w1_bf16, b1, w2_bf16, b2)
    out = jax.block_until_ready(out)

    # Pure-JAX reference using the same bf16-operand / f32-accumulate path.
    xb = x.reshape(-1, hid_dim).astype(jnp.bfloat16)
    h_ref = jnp.maximum(
        jnp.dot(xb, w1_bf16, preferred_element_type=jnp.float32) + b1, 0.0)
    ref = (jnp.dot(h_ref.astype(jnp.bfloat16), w2_bf16,
                   preferred_element_type=jnp.float32) + b2)
    ref = ref.reshape(batch, seq, hid_dim)

    assert out.shape == (batch, seq, hid_dim)
    assert out.dtype == x.dtype
    assert jnp.allclose(out.astype(jnp.float32), ref, atol=2e-2, rtol=2e-2), \
        "mismatch vs reference"

    print("KERNEL_OK")
</pallas_src>

<mosaic_0001>
module attributes {stable_mosaic.version = 11 : i64} {
  func.func @_ffn_fused_kernel(%arg0: i32, %arg1: memref<8x32xf32, #tpu.memory_space<vmem>>, %arg2: memref<32x64xbf16, #tpu.memory_space<vmem>>, %arg3: memref<1x64xf32, #tpu.memory_space<vmem>>, %arg4: memref<64x32xbf16, #tpu.memory_space<vmem>>, %arg5: memref<1x32xf32, #tpu.memory_space<vmem>>, %arg6: memref<8x32xf32, #tpu.memory_space<vmem>>) attributes {dimension_semantics = [#tpu.dimension_semantics<parallel>], iteration_bounds = array<i64: 2>, scalar_prefetch = 0 : i64, scratch_operands = 0 : i64, tpu.core_type = #tpu.core_type<tc>, window_params = [{transform_indices = @transform_0, window_bounds = array<i64: 8, 32>}, {pipeline_mode = #tpu.pipeline_mode<synchronous>, transform_indices = @transform_1, window_bounds = array<i64: 32, 64>}, {pipeline_mode = #tpu.pipeline_mode<synchronous>, transform_indices = @transform_2, window_bounds = array<i64: 1, 64>}, {pipeline_mode = #tpu.pipeline_mode<synchronous>, transform_indices = @transform_3, window_bounds = array<i64: 64, 32>}, {pipeline_mode = #tpu.pipeline_mode<synchronous>, transform_indices = @transform_4, window_bounds = array<i64: 1, 32>}, {transform_indices = @transform_5, window_bounds = array<i64: 8, 32>}]} {
    %c0 = arith.constant 0 : index
    %c0_0 = arith.constant 0 : index
    %0 = vector.load %arg1[%c0, %c0_0] : memref<8x32xf32, #tpu.memory_space<vmem>>, vector<8x32xf32>
    %1 = arith.truncf %0 : vector<8x32xf32> to vector<8x32xbf16>
    %c0_1 = arith.constant 0 : index
    %c0_2 = arith.constant 0 : index
    %2 = vector.load %arg2[%c0_1, %c0_2] : memref<32x64xbf16, #tpu.memory_space<vmem>>, vector<32x64xbf16>
    %cst = arith.constant dense<0.000000e+00> : vector<8x64xf32>
    %3 = tpu.matmul %1, %2, %cst {dimension_numbers = #tpu.dot_dimension_numbers<[1], [0], [0], [1], [0, 0, 1, 1], [], []>} : vector<8x32xbf16>, vector<32x64xbf16>, vector<8x64xf32> -> vector<8x64xf32>
    %c0_3 = arith.constant 0 : index
    %c0_4 = arith.constant 0 : index
    %4 = vector.load %arg3[%c0_3, %c0_4] : memref<1x64xf32, #tpu.memory_space<vmem>>, vector<1x64xf32>
    %5 = vector.broadcast %4 : vector<1x64xf32> to vector<8x64xf32>
    %6 = arith.addf %3, %5 : vector<8x64xf32>
    %cst_5 = arith.constant 0.000000e+00 : f32
    %7 = vector.broadcast %cst_5 : f32 to vector<8x64xf32>
    %8 = arith.maximumf %6, %7 : vector<8x64xf32>
    %9 = arith.truncf %8 : vector<8x64xf32> to vector<8x64xbf16>
    %c0_6 = arith.constant 0 : index
    %c0_7 = arith.constant 0 : index
    %10 = vector.load %arg4[%c0_6, %c0_7] : memref<64x32xbf16, #tpu.memory_space<vmem>>, vector<64x32xbf16>
    %cst_8 = arith.constant dense<0.000000e+00> : vector<8x32xf32>
    %11 = tpu.matmul %9, %10, %cst_8 {dimension_numbers = #tpu.dot_dimension_numbers<[1], [0], [0], [1], [0, 0, 1, 1], [], []>} : vector<8x64xbf16>, vector<64x32xbf16>, vector<8x32xf32> -> vector<8x32xf32>
    %c0_9 = arith.constant 0 : index
    %c0_10 = arith.constant 0 : index
    %12 = vector.load %arg5[%c0_9, %c0_10] : memref<1x32xf32, #tpu.memory_space<vmem>>, vector<1x32xf32>
    %13 = vector.broadcast %12 : vector<1x32xf32> to vector<8x32xf32>
    %14 = arith.addf %11, %13 : vector<8x32xf32>
    %c0_11 = arith.constant 0 : index
    %c0_12 = arith.constant 0 : index
    %15 = vector.load %arg6[%c0_11, %c0_12] : memref<8x32xf32, #tpu.memory_space<vmem>>, vector<8x32xf32>
    tpu.vector_store %arg6[%c0_11, %c0_12], %14 {strides = array<i32>} : memref<8x32xf32, #tpu.memory_space<vmem>>, vector<8x32xf32>,
    return
  }
  func.func @transform_0(%arg0: i32) -> (i32, i32) {
    %c0_i32 = arith.constant 0 : i32
    %c0_i32_0 = arith.constant 0 : i32
    return %arg0, %c0_i32 : i32, i32
  }
  func.func @transform_1(%arg0: i32) -> (i32, i32) {
    %c0_i32 = arith.constant 0 : i32
    %c0_i32_0 = arith.constant 0 : i32
    %c0_i32_1 = arith.constant 0 : i32
    return %c0_i32, %c0_i32_0 : i32, i32
  }
  func.func @transform_2(%arg0: i32) -> (i32, i32) {
    %c0_i32 = arith.constant 0 : i32
    %c0_i32_0 = arith.constant 0 : i32
    %c0_i32_1 = arith.constant 0 : i32
    return %c0_i32, %c0_i32_0 : i32, i32
  }
  func.func @transform_3(%arg0: i32) -> (i32, i32) {
    %c0_i32 = arith.constant 0 : i32
    %c0_i32_0 = arith.constant 0 : i32
    %c0_i32_1 = arith.constant 0 : i32
    return %c0_i32, %c0_i32_0 : i32, i32
  }
  func.func @transform_4(%arg0: i32) -> (i32, i32) {
    %c0_i32 = arith.constant 0 : i32
    %c0_i32_0 = arith.constant 0 : i32
    %c0_i32_1 = arith.constant 0 : i32
    return %c0_i32, %c0_i32_0 : i32, i32
  }
  func.func @transform_5(%arg0: i32) -> (i32, i32) {
    %c0_i32 = arith.constant 0 : i32
    %c0_i32_0 = arith.constant 0 : i32
    return %arg0, %c0_i32 : i32, i32
  }
}

</mosaic_0001>

<llo_original>
// kernel: positionwise_feedforward.1
$region0: #{positionwise_feedforward.1}
  #allocation0 [shape = 'u32[]', space=smem, size = 0x4, offset = 0x4, fixed_abs, tag = 'smem constant byte address 0x4 - core index']
  #allocation1 [shape = 'u32[144,128]{1,0:T(1,128)}', space=vmem, size = 0x12000, scoped, tag = 'internal scratch']
  %s0 = inlined_call_operand.vmem [shape: f32[16,32], index: 0, kind: input, shape index: {}]
  %s1 = inlined_call_operand.vmem [shape: bf16[32,64], index: 1, kind: input, shape index: {}]
  %s2 = inlined_call_operand.vmem [shape: f32[1,64], index: 2, kind: input, shape index: {}]
  %s3 = inlined_call_operand.vmem [shape: bf16[64,32], index: 3, kind: input, shape index: {}]
  %s4 = inlined_call_operand.vmem [shape: f32[1,32], index: 4, kind: input, shape index: {}]
  %s5 = inlined_call_operand.hbm [shape: f32[16,32], index: 5, kind: output, shape index: {}]
  %s6 = sld [smem:[#allocation0]]
  $region53: #{positionwise_feedforward.1} parent=0
    _
  %s8 = ssub.s32 1, %s6
  %s9 = scalar_select 0, %s8, %s6
  $region1: #{positionwise_feedforward.1} parent=0
    #allocation2 [shape = 'u8[8192]{0}', space=vmem, size = 0x2000, scoped, tag = 'output window, operand 0']
    #allocation3 [shape = 's32[2]{0}', space=sflag, size = 0x8, scoped, tag = 'scoped memory for positionwise_feedforward.1']
    %10 = vsyncpa [#allocation3], 0
    %s11 = scalar_lea.sflag [#allocation3], 1
    %12 = vsyncpa %s11, 0
    loop: start=0, step=1, limit=4
    $region2: #{positionwise_feedforward.1} parent=1 // loop_pre_header
      _
    $region3: #{positionwise_feedforward.1} parent=1 // loop_header
      %s14 = sphi 0, %s18
      %p15 = scmp.ge.s32.totalorder %s14, 4
      %s24 = sphi 0, %s26
      %s27 = sphi 0, %s24
      %s28 = sphi 0, %s27
      %s44 = sphi 0, %s28
      %s48 = sphi 0, %s48
      %s50 = sphi 0, %s48
      %s51 = sphi 0, %s50
      %s65 = sphi 0, %s51
      %s69 = sphi 0, %s69
      %s71 = sphi 0, %s69
      %s72 = sphi 0, %s71
      %s86 = sphi 0, %s72
      %s90 = sphi 0, %s90
      %s92 = sphi 0, %s90
      %s93 = sphi 0, %s92
      %s107 = sphi 0, %s93
      %s111 = sphi 0, %s111
      %s113 = sphi 0, %s111
      %s114 = sphi 0, %s113
      %s128 = sphi 0, %s114
      %s134 = sphi 0, %s136
      %s137 = sphi 0, %s134
      %s138 = sphi 0, %s137
      %s154 = sphi 0, %s138
    $region4: #{positionwise_feedforward.1} parent=1 // loop_header_branch
      %17 = sbr.rel (%p15) target = $region8
    $region5: #{positionwise_feedforward.1} parent=1 // loop_body
      %s19 = ssub.s32 %s14, 1
      %s20 = ssub.s32 %s14, 2
      %s21 = sadd.s32 %s14, 1
      %s22 = ssub.s32 %s14, %s21
      %p23 = scmp.eq.s32.totalorder %s22, 0
      %s25 = sadd.s32 %s24, 1
      %s26 = scalar_select %p23, %s24, %s25
      %p29 = pneg %p23
      %p30 = scmp.eq.s32.totalorder %s14, 1
      %p31 = por %p29, %p30
      %p32 = scmp.ne.s32.totalorder %s24, %s27
      %p33 = scmp.eq.s32.totalorder %s14, 0
      %p34 = por %p32, %p33
      %p35 = scmp.ne.s32.totalorder %s24, %s27
      %p36 = scmp.eq.s32.totalorder %s19, 1
      %p37 = por %p35, %p36
      %p38 = scmp.ne.s32.totalorder %s27, %s28
      %p39 = scmp.eq.s32.totalorder %s19, 0
      %p40 = por %p38, %p39
      %p41 = scmp.ne.s32.totalorder %s27, %s28
      %p42 = scmp.eq.s32.totalorder %s20, 1
      %p43 = por %p41, %p42
      %p45 = scmp.ne.s32.totalorder %s28, %s44
      %p46 = scmp.eq.s32.totalorder %s20, 0
      %p47 = por %p45, %p46
      %s49 = sadd.s32 %s48, 1
      %p52 = scmp.eq.s32.totalorder %s14, 1
      %p53 = scmp.ne.s32.totalorder %s48, %s50
      %p54 = scmp.eq.s32.totalorder %s14, 0
      %p55 = por %p53, %p54
      %p56 = scmp.ne.s32.totalorder %s48, %s50
      %p57 = scmp.eq.s32.totalorder %s19, 1
      %p58 = por %p56, %p57
      %p59 = scmp.ne.s32.totalorder %s50, %s51
      %p60 = scmp.eq.s32.totalorder %s19, 0
      %p61 = por %p59, %p60
      %p62 = scmp.ne.s32.totalorder %s50, %s51
      %p63 = scmp.eq.s32.totalorder %s20, 1
      %p64 = por %p62, %p63
      %p66 = scmp.ne.s32.totalorder %s51, %s65
      %p67 = scmp.eq.s32.totalorder %s20, 0
      %p68 = por %p66, %p67
      %s70 = sadd.s32 %s69, 1
      %p73 = scmp.eq.s32.totalorder %s14, 1
      %p74 = scmp.ne.s32.totalorder %s69, %s71
      %p75 = scmp.eq.s32.totalorder %s14, 0
      %p76 = por %p74, %p75
      %p77 = scmp.ne.s32.totalorder %s69, %s71
      %p78 = scmp.eq.s32.totalorder %s19, 1
      %p79 = por %p77, %p78
      %p80 = scmp.ne.s32.totalorder %s71, %s72
      %p81 = scmp.eq.s32.totalorder %s19, 0
      %p82 = por %p80, %p81
      %p83 = scmp.ne.s32.totalorder %s71, %s72
      %p84 = scmp.eq.s32.totalorder %s20, 1
      %p85 = por %p83, %p84
      %p87 = scmp.ne.s32.totalorder %s72, %s86
      %p88 = scmp.eq.s32.totalorder %s20, 0
      %p89 = por %p87, %p88
      %s91 = sadd.s32 %s90, 1
      %p94 = scmp.eq.s32.totalorder %s14, 1
      %p95 = scmp.ne.s32.totalorder %s90, %s92
      %p96 = scmp.eq.s32.totalorder %s14, 0
      %p97 = por %p95, %p96
      %p98 = scmp.ne.s32.totalorder %s90, %s92
      %p99 = scmp.eq.s32.totalorder %s19, 1
      %p100 = por %p98, %p99
      %p101 = scmp.ne.s32.totalorder %s92, %s93
      %p102 = scmp.eq.s32.totalorder %s19, 0
      %p103 = por %p101, %p102
      %p104 = scmp.ne.s32.totalorder %s92, %s93
      %p105 = scmp.eq.s32.totalorder %s20, 1
      %p106 = por %p104, %p105
      %p108 = scmp.ne.s32.totalorder %s93, %s107
      %p109 = scmp.eq.s32.totalorder %s20, 0
      %p110 = por %p108, %p109
      %s112 = sadd.s32 %s111, 1
      %p115 = scmp.eq.s32.totalorder %s14, 1
      %p116 = scmp.ne.s32.totalorder %s111, %s113
      %p117 = scmp.eq.s32.totalorder %s14, 0
      %p118 = por %p116, %p117
      %p119 = scmp.ne.s32.totalorder %s111, %s113
      %p120 = scmp.eq.s32.totalorder %s19, 1
      %p121 = por %p119, %p120
      %p122 = scmp.ne.s32.totalorder %s113, %s114
      %p123 = scmp.eq.s32.totalorder %s19, 0
      %p124 = por %p122, %p123
      %p125 = scmp.ne.s32.totalorder %s113, %s114
      %p126 = scmp.eq.s32.totalorder %s20, 1
      %p127 = por %p125, %p126
      %p129 = scmp.ne.s32.totalorder %s114, %s128
      %p130 = scmp.eq.s32.totalorder %s20, 0
      %p131 = por %p129, %p130
      %s132 = ssub.s32 %s14, %s21
      %p133 = scmp.eq.s32.totalorder %s132, 0
      %s135 = sadd.s32 %s134, 1
      %s136 = scalar_select %p133, %s134, %s135
      %p139 = pneg %p133
      %p140 = scmp.eq.s32.totalorder %s14, 1
      %p141 = por %p139, %p140
      %p142 = scmp.ne.s32.totalorder %s134, %s137
      %p143 = scmp.eq.s32.totalorder %s14, 0
      %p144 = por %p142, %p143
      %p145 = scmp.ne.s32.totalorder %s134, %s137
      %p146 = scmp.eq.s32.totalorder %s19, 1
      %p147 = por %p145, %p146
      %p148 = scmp.ne.s32.totalorder %s137, %s138
      %p149 = scmp.eq.s32.totalorder %s19, 0
      %p150 = por %p148, %p149
      %p151 = scmp.ne.s32.totalorder %s137, %s138
      %p152 = scmp.eq.s32.totalorder %s20, 1
      %p153 = por %p151, %p152
      %p155 = scmp.ne.s32.totalorder %s138, %s154
      %p156 = scmp.eq.s32.totalorder %s20, 0
      %p157 = por %p155, %p156
      %p158 = scmp.le.s32.totalorder 1, %s14
      %p159 = scmp.lt.s32.totalorder %s14, 3
      %p160 = pnand %p158, %p159
      %p161 = pneg %p160
      // Predicated region
      $region9: #{positionwise_feedforward.1} parent=5 // pred_check
        _
      $region10: #{positionwise_feedforward.1} parent=5 // pred_check_branch
        %163 = sbr.rel (%p160) target = $region12
      $region11: #{positionwise_feedforward.1} parent=5 // pred_region
        %s164 = ssub.s32 %s14, 1
        // Predicated region
        $region13: #{positionwise_feedforward.1} parent=11 // pred_check
          %p165 = pneg %p61
        $region14: #{positionwise_feedforward.1} parent=11 // pred_check_branch
          %167 = sbr.rel (%p165) target = $region16
        $region15: #{positionwise_feedforward.1} parent=11 // pred_region
          _
        $region16: #{positionwise_feedforward.1} parent=11 // pred_fallthru
          _
        // Predicated region
        $region17: #{positionwise_feedforward.1} parent=11 // pred_check
          %p168 = pneg %p82
        $region18: #{positionwise_feedforward.1} parent=11 // pred_check_branch
          %170 = sbr.rel (%p168) target = $region20
        $region19: #{positionwise_feedforward.1} parent=11 // pred_region
          _
        $region20: #{positionwise_feedforward.1} parent=11 // pred_fallthru
          _
        // Predicated region
        $region21: #{positionwise_feedforward.1} parent=11 // pred_check
          %p171 = pneg %p103
        $region22: #{positionwise_feedforward.1} parent=11 // pred_check_branch
          %173 = sbr.rel (%p171) target = $region24
        $region23: #{positionwise_feedforward.1} parent=11 // pred_region
          _
        $region24: #{positionwise_feedforward.1} parent=11 // pred_fallthru
          _
        // Predicated region
        $region25: #{positionwise_feedforward.1} parent=11 // pred_check
          %p174 = pneg %p124
        $region26: #{positionwise_feedforward.1} parent=11 // pred_check_branch
          %176 = sbr.rel (%p174) target = $region28
        $region27: #{positionwise_feedforward.1} parent=11 // pred_region
          _
        $region28: #{positionwise_feedforward.1} parent=11 // pred_fallthru
          _
      $region12: #{positionwise_feedforward.1} parent=5 // pred_fallthru
        _
      %p177 = scmp.lt.s32.totalorder %s14, 2
      // Predicated region
      $region29: #{positionwise_feedforward.1} parent=5 // pred_check
        %p178 = pneg %p177
      $region30: #{positionwise_feedforward.1} parent=5 // pred_check_branch
        %180 = sbr.rel (%p178) target = $region32
      $region31: #{positionwise_feedforward.1} parent=5 // pred_region
        // Predicated region
        $region33: #{positionwise_feedforward.1} parent=31 // pred_check
          %p181 = pneg %p34
        $region34: #{positionwise_feedforward.1} parent=31 // pred_check_branch
          %183 = sbr.rel (%p181) target = $region36
        $region35: #{positionwise_feedforward.1} parent=31 // pred_region
          %p184 = scmp.lt.s32.totalorder %s14, 1
          %s185 = scalar_select %p184, %s14, 1
          %s186 = smul.addr %s185, 8
          %s187 = scalar_lea.vmem %s0, %s186
        $region36: #{positionwise_feedforward.1} parent=31 // pred_fallthru
          _
      $region32: #{positionwise_feedforward.1} parent=5 // pred_fallthru
        _
      %p188 = scmp.le.s32.totalorder 1, %s14
      %p189 = scmp.lt.s32.totalorder %s14, 3
      %p190 = pnand %p188, %p189
      %p191 = pneg %p190
      // Predicated region
      $region37: #{positionwise_feedforward.1} parent=5 // pred_check
        _
      $region38: #{positionwise_feedforward.1} parent=5 // pred_check_branch
        %193 = sbr.rel (%p190) target = $region40
      $region39: #{positionwise_feedforward.1} parent=5 // pred_region
        %s194 = ssub.s32 %s14, 1
        %p195 = scmp.lt.s32.totalorder %s19, 1
        %s196 = scalar_select %p195, %s19, 1
        %s197 = smul.addr %s196, 8
        %s198 = scalar_lea.vmem %s0, %s197
        %p199 = pneg %p40
        %p200 = pneg %p37
        %p201 = pneg %p61
        %p202 = pneg %p58
        %p203 = pneg %p82
        %p204 = pneg %p79
        %p205 = pneg %p103
        %p206 = pneg %p100
        %p207 = pneg %p124
        %p208 = pneg %p121
        %p209 = pneg %p150
        %p210 = pneg %p147
        %s211 = sand.u32 %s137, 1
        %s212 = scalar_lea.sflag [#allocation3], %s211
        %s213 = sand.u32 %s137, 1
        %s214 = smul.addr %s213, 8
        %s215 = scalar_lea.vmem [#allocation2], %s214
        %p216 = scmp.lt.s32.totalorder %s19, 1
        %s217 = scalar_select %p216, %s19, 1
        %s218 = smul.addr %s217, 8
        %s219 = scalar_lea.vmem %s0, %s218
        %v221 = vld [vmem:[%s219] sm:$0xff]
        %v222 = vpack.c.bf16 %v221, %v221
        %v223 = vld [vmem:[%s1] sm:$0xf]
        %v224 = vld [vmem:[%s1 + $0x4] sm:$0xf]
        %v225 = vld [vmem:[%s1 + $0x8] sm:$0xf]
        %v226 = vld [vmem:[%s1 + $0xc] sm:$0xf]
        %v227 = vld [vmem:[%s2] sm:$0x1]
        %v229 = vlaneseq
        %v230 = vshrl.u32 %v229, 7
        %v231 = vsub.s32 0, %v230
        %v232 = vrot.slane %v227, %v231
        %v238 = vunpack.c.l.b16 %v223
        %v239 = vunpack.c.l.b16 %v224
        %v240 = vunpack.c.l.b16 %v225
        %v241 = vunpack.c.l.b16 %v226
        %v242 = vpack.c.b16 %v239, %v238
        %v243 = vpack.c.b16 %v241, %v240
        %vm246 = vcmask 261120
        %v248 = vsel %vm246, %v222, 0
        %250 = vmatprep.subr.bf16.mxu0 0
        %251 = vmatpush1.bf16.msra.mxu0 %v242
        %252 = vmatprep.subr.bf16.mxu0 0
        %253 = vmatpush1.bf16.msra.mxu0 %v243
        %254 = vmatprep.subr.bf16.mxu0 0
        %255 = vmatpush1.bf16.msra.mxu0 0
        %256 = vmatprep.subr.bf16.mxu0 0
        %257 = vmatpush1.bf16.msra.mxu0 0
        %258 = vmatprep.subr.bf16.mxu0 0
        %259 = vmatpush1.bf16.msra.mxu0 0
        %260 = vmatprep.subr.bf16.mxu0 0
        %261 = vmatpush1.bf16.msra.mxu0 0
        %262 = vmatprep.subr.bf16.mxu0 0
        %263 = vmatpush1.bf16.msra.mxu0 0
        %264 = vmatprep.subr.bf16.mxu0 0
        %265 = vmatpush1.bf16.msra.mxu0 0
        %266 = vmatprep.subr.bf16.mxu0 0
        %267 = vmatpush1.bf16.msra.mxu0 0
        %268 = vmatprep.subr.bf16.mxu0 0
        %269 = vmatpush1.bf16.msra.mxu0 0
        %270 = vmatprep.subr.bf16.mxu0 0
        %271 = vmatpush1.bf16.msra.mxu0 0
        %272 = vmatprep.subr.bf16.mxu0 0
        %273 = vmatpush1.bf16.msra.mxu0 0
        %274 = vmatprep.subr.bf16.mxu0 0
        %275 = vmatpush1.bf16.msra.mxu0 0
        %276 = vmatprep.subr.bf16.mxu0 0
        %277 = vmatpush1.bf16.msra.mxu0 0
        %278 = vmatprep.subr.bf16.mxu0 0
        %279 = vmatpush1.bf16.msra.mxu0 0
        %280 = vmatprep.subr.bf16.mxu0 0
        %281 = vmatpush1.bf16.msra.mxu0 0
        %282 = vmatprep.mubr.bf16.mxu0 0
        %283 = vmatmul.mubr.bf16.gmra.mrb[0].mxu0 %v248
        %v284 = vpop.f32.mrb[0].mxu0
        %v285 = vadd.f32 %v232, %v284
        %v286 = vpop.f32.mrb[0].mxu0
        %v287 = vpop.f32.mrb[0].mxu0
        %v288 = vpop.f32.mrb[0].mxu0
        %289 = vdwg.mxu0
        %v290 = vmax.f32 %v285, 0.0
        %v291 = vpack.c.bf16 %v290, %v290
        %v292 = vld [vmem:[%s3] sm:$0xf]
        %v293 = vld [vmem:[%s3 + $0x4] sm:$0xf]
        %v294 = vld [vmem:[%s3 + $0x8] sm:$0xf]
        %v295 = vld [vmem:[%s3 + $0xc] sm:$0xf]
        %v296 = vld [vmem:[%s3 + $0x10] sm:$0xf]
        %v297 = vld [vmem:[%s3 + $0x14] sm:$0xf]
        %v298 = vld [vmem:[%s3 + $0x18] sm:$0xf]
        %v299 = vld [vmem:[%s3 + $0x1c] sm:$0xf]
        %v300 = vld [vmem:[%s4] sm:$0x1]
        %v302 = vlaneseq
        %v303 = vshrl.u32 %v302, 7
        %v304 = vsub.s32 0, %v303
        %v305 = vrot.slane %v300, %v304
        %v315 = vunpack.c.l.b16 %v292
        %v316 = vunpack.c.l.b16 %v293
        %v317 = vunpack.c.l.b16 %v294
        %v318 = vunpack.c.l.b16 %v295
        %v319 = vunpack.c.l.b16 %v296
        %v320 = vunpack.c.l.b16 %v297
        %v321 = vunpack.c.l.b16 %v298
        %v322 = vunpack.c.l.b16 %v299
        %v323 = vpack.c.b16 %v316, %v315
        %v324 = vpack.c.b16 %v318, %v317
        %v325 = vpack.c.b16 %v320, %v319
        %v326 = vpack.c.b16 %v322, %v321
        %vm331 = vcmask 523264
        %v333 = vsel %vm331, %v291, 0
        %335 = vmatprep.subr.bf16.mxu0 0
        %336 = vmatpush1.bf16.msra.mxu0 %v323
        %337 = vmatprep.subr.bf16.mxu0 0
        %338 = vmatpush1.bf16.msra.mxu0 %v324
        %339 = vmatprep.subr.bf16.mxu0 0
        %340 = vmatpush1.bf16.msra.mxu0 %v325
        %341 = vmatprep.subr.bf16.mxu0 0
        %342 = vmatpush1.bf16.msra.mxu0 %v326
        %343 = vmatprep.subr.bf16.mxu0 0
        %344 = vmatpush1.bf16.msra.mxu0 0
        %345 = vmatprep.subr.bf16.mxu0 0
        %346 = vmatpush1.bf16.msra.mxu0 0
        %347 = vmatprep.subr.bf16.mxu0 0
        %348 = vmatpush1.bf16.msra.mxu0 0
        %349 = vmatprep.subr.bf16.mxu0 0
        %350 = vmatpush1.bf16.msra.mxu0 0
        %351 = vmatprep.subr.bf16.mxu0 0
        %352 = vmatpush1.bf16.msra.mxu0 0
        %353 = vmatprep.subr.bf16.mxu0 0
        %354 = vmatpush1.bf16.msra.mxu0 0
        %355 = vmatprep.subr.bf16.mxu0 0
        %356 = vmatpush1.bf16.msra.mxu0 0
        %357 = vmatprep.subr.bf16.mxu0 0
        %358 = vmatpush1.bf16.msra.mxu0 0
        %359 = vmatprep.subr.bf16.mxu0 0
        %360 = vmatpush1.bf16.msra.mxu0 0
        %361 = vmatprep.subr.bf16.mxu0 0
        %362 = vmatpush1.bf16.msra.mxu0 0
        %363 = vmatprep.subr.bf16.mxu0 0
        %364 = vmatpush1.bf16.msra.mxu0 0
        %365 = vmatprep.subr.bf16.mxu0 0
        %366 = vmatpush1.bf16.msra.mxu0 0
        %367 = vmatprep.mubr.bf16.mxu0 0
        %368 = vmatmul.mubr.bf16.gmra.mrb[0].mxu0 %v333
        %v369 = vpop.f32.mrb[0].mxu0
        %v370 = vadd.f32 %v305, %v369
        %v371 = vpop.f32.mrb[0].mxu0
        %v372 = vpop.f32.mrb[0].mxu0
        %v373 = vpop.f32.mrb[0].mxu0
        %374 = vdwg.mxu0
        %375 = vst.msk [vmem:[%s215] sm:$0xff] %vm246, %v370
        %s376 = sand.u32 %s137, 1
        %s377 = scalar_lea.sflag [#allocation3], %s376
        %s378 = sand.u32 %s137, 1
        %s379 = smul.addr %s378, 8
        %s380 = scalar_lea.vmem [#allocation2], %s379
        // Predicated region
        $region41: #{positionwise_feedforward.1} parent=39 // pred_check
          %p381 = pneg %p147
        $region42: #{positionwise_feedforward.1} parent=39 // pred_check_branch
          %383 = sbr.rel (%p381) target = $region44
        $region43: #{positionwise_feedforward.1} parent=39 // pred_region
          %s385 = ssub.s32 128, 128
          %386 = vsyncadd %s377, %s385
          %s387 = smul.addr %s19, 128
          %s388 = scalar_lea.hbm %s5, %s387
          %s390 = sshll.u32 %s380, 4
          %s391 = int_to_ptr.vmem [resolvable:$true] %s390
          %393 = dma.vmem_to_hbm [thread:$0]  %s391, 128, %s388, %s377
        $region44: #{positionwise_feedforward.1} parent=39 // pred_fallthru
          _
      $region40: #{positionwise_feedforward.1} parent=5 // pred_fallthru
        _
      %p394 = scmp.le.s32.totalorder 2, %s14
      // Predicated region
      $region45: #{positionwise_feedforward.1} parent=5 // pred_check
        %p395 = pneg %p394
      $region46: #{positionwise_feedforward.1} parent=5 // pred_check_branch
        %397 = sbr.rel (%p395) target = $region48
      $region47: #{positionwise_feedforward.1} parent=5 // pred_region
        %s398 = ssub.s32 %s14, 2
        // Predicated region
        $region49: #{positionwise_feedforward.1} parent=47 // pred_check
          %p399 = pneg %p153
        $region50: #{positionwise_feedforward.1} parent=47 // pred_check_branch
          %401 = sbr.rel (%p399) target = $region52
        $region51: #{positionwise_feedforward.1} parent=47 // pred_region
          %s402 = sand.u32 %s138, 1
          %s403 = scalar_lea.sflag [#allocation3], %s402
          %s404 = sand.u32 %s138, 1
          %s405 = smul.addr %s404, 8
          %s406 = scalar_lea.vmem [#allocation2], %s405
          %407 = dma.done %s403, 128
        $region52: #{positionwise_feedforward.1} parent=47 // pred_fallthru
          _
      $region48: #{positionwise_feedforward.1} parent=5 // pred_fallthru
        _
    $region6: #{positionwise_feedforward.1} parent=1 // loop_footer
      %s18 = sadd.s32 1, %s14
    $region7: #{positionwise_feedforward.1} parent=1 // loop_footer_branch
      %13 = sbr.rel target = $region3
    $region8: #{positionwise_feedforward.1} parent=1 // loop_exit
      _
    %408 = vsyncpa [#allocation3], 1
    %s409 = scalar_lea.sflag [#allocation3], 1
    %410 = vsyncpa %s409, 1

</llo_original>
